<compile_context>
chip_gen: v7x
topology: tpu7x:2x2x1
jax: 0.10.0
libtpu: 0.0.40
codegen_flags: <defaults>
</compile_context>

<pallas_src>
import functools

import jax
import jax.numpy as jnp
from jax import lax
from jax.experimental import pallas as pl
from jax.experimental.pallas import tpu as pltpu


def _round_up(x, m):
    return ((x + m - 1) // m) * m


def _rnn_recurrence_kernel(gx_ref, whh_ref, h_last_ref, h_scratch):
    """One (batch-block, time-block) grid step of the serial tanh recurrence.

    gx_ref:     (Tt, Bb, Hp)  -- precomputed x_t @ W_ih^T + (b_ih+b_hh), streamed.
    whh_ref:    (Hp, Hp)      -- W_hh^T, same block every grid step.
    h_last_ref: (Bb, Hp) f32  -- output block; written only on the last time tile.
    h_scratch:  (Bb, Hp) f32  -- hidden state carried across time tiles.
    """
    t_idx = pl.program_id(1)

    @pl.when(t_idx == 0)
    def _init():
        h_scratch[...] = jnp.zeros_like(h_scratch)

    Tt, _, Hp = gx_ref.shape
    # Hoist W_hh into vregs only when it is small enough (Hp == 128); wider
    # hidden would guarantee spills, so reload from VMEM per step instead.
    hoist_whh = Hp <= 128
    whh_hoisted = whh_ref[...] if hoist_whh else None

    def step(t, h):
        w = whh_hoisted if hoist_whh else whh_ref[...]
        acc = jnp.dot(h.astype(w.dtype), w, preferred_element_type=jnp.float32)
        return jnp.tanh(gx_ref[t].astype(jnp.float32) + acc)

    # Partial unroll keeps scheduler visibility without code bloat on long tiles.
    unroll = True if Tt <= 16 else 8
    h = lax.fori_loop(0, Tt, step, h_scratch[...], unroll=unroll)
    h_scratch[...] = h

    @pl.when(t_idx == pl.num_programs(1) - 1)
    def _store():
        h_last_ref[...] = h  # single lane-dense store per batch block


@functools.partial(jax.jit, static_argnames=("use_bf16_matmul",))
def rnn_forward(text, params, use_bf16_matmul=False):
    """text: (seq_len, batch) int32 token ids (seq-major, nn.RNN default).
    Returns fc(last hidden): (batch, output_dim)."""
    emb_table = params["embedding"]       # (V, E)
    w_ih_t = params["w_ih_t"]             # (E, Hp)  = weight_ih_l0.T (lane padded)
    w_hh_t = params["w_hh_t"]             # (Hp, Hp) = weight_hh_l0.T (padded)
    b = params["b"]                       # (1, Hp)  = b_ih + b_hh (lane padded)
    w_fc_t = params["w_fc_t"]             # (Hp, O)  = fc.weight.T (row padded)
    b_fc = params["b_fc"]                 # (1, O)

    T, B = text.shape
    E = emb_table.shape[1]
    Hp = w_hh_t.shape[0]

    # ---- static padding / tiling choices ------------------------------------
    Bp = _round_up(B, 8)                                   # sublane multiple
    # Leading "parallel" batch axis: v7x's two TensorCores each take half the
    # padded batch rows; no effect on v5e/v6e (1 TC).
    Bb = Bp // 2 if (Bp >= 16 and Bp % 16 == 0) else Bp
    num_b = Bp // Bb

    elt = 2 if use_bf16_matmul else 4
    # Per-buffer gx tile budget; double-buffered stream + whh + h + out must
    # stay well inside v7x's 64 MiB physical VMEM.
    gx_budget = 6 * 1024 * 1024
    Tt = max(1, min(T, gx_budget // (Bb * Hp * elt)))
    num_t = pl.cdiv(T, Tt)
    Tp = num_t * Tt

    # ---- XLA glue: gather + hoisted input projection, produced pre-padded ---
    text_p = jnp.pad(text, ((0, 0), (0, Bp - B))) if Bp > B else text
    embedded = jnp.take(emb_table, text_p, axis=0)          # (T, Bp, E)
    # One big (T*Bp, E) x (E, Hp) MXU matmul with the bias fused; already
    # lane-padded because w_ih_t / b carry zero padding (bias added before pad).
    gx = (embedded.reshape(T * Bp, E) @ w_ih_t + b).reshape(T, Bp, Hp)

    if use_bf16_matmul:
        gx = gx.astype(jnp.bfloat16)
        w_hh = w_hh_t.astype(jnp.bfloat16)
    else:
        w_hh = w_hh_t

    # Pad time at the FRONT with zero steps: with h0 = 0 they are exactly
    # inert (tanh(0 + 0 @ Whh) = 0), so the recurrence result is unchanged.
    if Tp > T:
        gx = jnp.concatenate(
            [jnp.zeros((Tp - T, Bp, Hp), gx.dtype), gx], axis=0)

    vmem_bytes = (2 * Tt * Bb * Hp * elt      # double-buffered gx stream
                  + 2 * Hp * Hp * elt         # whh (conservatively x2)
                  + 2 * Bb * Hp * 4           # output block
                  + Bb * Hp * 4)              # h scratch
    vmem_limit = int(min(max(2 * vmem_bytes, 16 * 1024 * 1024),
                         48 * 1024 * 1024))   # headroom on v7x's 64 MiB

    h_last_pad = pl.pallas_call(
        _rnn_recurrence_kernel,
        out_shape=jax.ShapeDtypeStruct((Bp, Hp), jnp.float32),
        grid_spec=pltpu.PrefetchScalarGridSpec(
            num_scalar_prefetch=0,
            grid=(num_b, num_t),                    # (parallel batch, serial time)
            in_specs=[
                pl.BlockSpec((Tt, Bb, Hp), lambda bi, ti: (ti, bi, 0)),  # gx
                pl.BlockSpec((Hp, Hp), lambda bi, ti: (0, 0)),           # W_hh^T
            ],
            out_specs=pl.BlockSpec((Bb, Hp), lambda bi, ti: (bi, 0)),
            scratch_shapes=[pltpu.VMEM((Bb, Hp), jnp.float32)],
        ),
        compiler_params=pltpu.CompilerParams(
            dimension_semantics=("parallel", "arbitrary"),
            vmem_limit_bytes=vmem_limit,
        ),
    )(gx, w_hh)

    # fc head on the last hidden.  Padded hidden lanes are exactly zero and
    # w_fc_t's padded rows are zero, so only the batch dim needs slicing.
    return h_last_pad[:B] @ w_fc_t + b_fc


def init_params(key, input_dim, embedding_dim, hidden_dim, output_dim):
    ks = jax.random.split(key, 7)
    E, H, O = embedding_dim, hidden_dim, output_dim
    Hp = _round_up(H, 128)                 # lane-pad the hidden dim ONCE here
    bound = 1.0 / (float(H) ** 0.5)
    u = lambda k, s: jax.random.uniform(k, s, jnp.float32, -bound, bound)
    w_ih_t = u(ks[1], (E, H))              # weight_ih_l0.T
    w_hh_t = u(ks[2], (H, H))              # weight_hh_l0.T
    b = u(ks[3], (1, H)) + u(ks[4], (1, H))  # b_ih + b_hh (added BEFORE padding)
    w_fc_t = u(ks[5], (H, O))              # fc.weight.T
    return {
        "embedding": jax.random.normal(ks[0], (input_dim, E), jnp.float32),
        "w_ih_t": jnp.pad(w_ih_t, ((0, 0), (0, Hp - H))),
        "w_hh_t": jnp.pad(w_hh_t, ((0, Hp - H), (0, Hp - H))),
        "b": jnp.pad(b, ((0, 0), (0, Hp - H))),
        "w_fc_t": jnp.pad(w_fc_t, ((0, Hp - H), (0, 0))),
        "b_fc": u(ks[6], (1, O)),
    }


def _reference(text, params):
    """Pure-JAX reference (Embedding -> tanh RNN -> fc).  Uses the padded
    params directly: padded lanes are zero and stay inert, so this equals the
    unpadded math exactly."""
    emb = jnp.take(params["embedding"], text, axis=0)   # (T, B, E)
    T, B, _ = emb.shape
    Hp = params["w_hh_t"].shape[0]
    h = jnp.zeros((B, Hp), jnp.float32)
    for t in range(T):
        h = jnp.tanh(emb[t] @ params["w_ih_t"] + h @ params["w_hh_t"]
                     + params["b"])
    return h @ params["w_fc_t"] + params["b_fc"]


if __name__ == "__main__":
    # Small shapes consistent with the module's forward.
    input_dim = 50        # vocab size
    embedding_dim = 16
    hidden_dim = 32
    output_dim = 4
    seq_len = 8
    batch = 2

    key = jax.random.PRNGKey(0)
    k_par, k_txt = jax.random.split(key)
    params = init_params(k_par, input_dim, embedding_dim, hidden_dim, output_dim)
    text = jax.random.randint(k_txt, (seq_len, batch), 0, input_dim, jnp.int32)

    fc_out = jax.block_until_ready(rnn_forward(text, params))
    ref = _reference(text, params)

    assert fc_out.shape == (batch, output_dim)
    assert jnp.allclose(fc_out, ref, atol=1e-5, rtol=1e-5)

    print("KERNEL_OK")
</pallas_src>

<mosaic_0001>
module attributes {stable_mosaic.version = 11 : i64} {
  func.func @_rnn_recurrence_kernel(%arg0: i32, %arg1: i32, %arg2: memref<8x8x128xf32, #tpu.memory_space<vmem>>, %arg3: memref<128x128xf32, #tpu.memory_space<vmem>>, %arg4: memref<8x128xf32, #tpu.memory_space<vmem>>, %arg5: memref<8x128xf32, #tpu.memory_space<vmem>>) attributes {dimension_semantics = [#tpu.dimension_semantics<parallel>, #tpu.dimension_semantics<arbitrary>], iteration_bounds = array<i64: 1, 1>, scalar_prefetch = 0 : i64, scratch_operands = 1 : i64, tpu.core_type = #tpu.core_type<tc>, window_params = [{transform_indices = @transform_0, window_bounds = array<i64: 8, 8, 128>}, {pipeline_mode = #tpu.pipeline_mode<synchronous>, transform_indices = @transform_1, window_bounds = array<i64: 128, 128>}, {transform_indices = @transform_2, window_bounds = array<i64: 8, 128>}]} {
    %c0_i32 = arith.constant 0 : i32
    %0 = arith.cmpi eq, %arg1, %c0_i32 : i32
    %1 = arith.extui %0 : i1 to i32
    %c0_i32_0 = arith.constant 0 : i32
    %2 = arith.cmpi ne, %1, %c0_i32_0 : i32
    scf.if %2 {
      %cst_32 = arith.constant 0.000000e+00 : f32
      %57 = vector.broadcast %cst_32 : f32 to vector<8x128xf32>
      %c0_33 = arith.constant 0 : index
      %c0_34 = arith.constant 0 : index
      %58 = vector.load %arg5[%c0_33, %c0_34] : memref<8x128xf32, #tpu.memory_space<vmem>>, vector<8x128xf32>
      tpu.vector_store %arg5[%c0_33, %c0_34], %57 {strides = array<i32>} : memref<8x128xf32, #tpu.memory_space<vmem>>, vector<8x128xf32>,
    } else {
    }
    %c0 = arith.constant 0 : index
    %c0_1 = arith.constant 0 : index
    %3 = vector.load %arg3[%c0, %c0_1] : memref<128x128xf32, #tpu.memory_space<vmem>>, vector<128x128xf32>
    %c0_2 = arith.constant 0 : index
    %c0_3 = arith.constant 0 : index
    %4 = vector.load %arg5[%c0_2, %c0_3] : memref<8x128xf32, #tpu.memory_space<vmem>>, vector<8x128xf32>
    %c0_i32_4 = arith.constant 0 : i32
    %cst = arith.constant dense<0.000000e+00> : vector<8x128xf32>
    %5 = tpu.matmul %4, %3, %cst {dimension_numbers = #tpu.dot_dimension_numbers<[1], [0], [0], [1], [0, 0, 1, 1], [], []>} : vector<8x128xf32>, vector<128x128xf32>, vector<8x128xf32> -> vector<8x128xf32>
    %6 = arith.index_cast %c0_i32_4 : i32 to index
    %c0_5 = arith.constant 0 : index
    %c0_6 = arith.constant 0 : index
    %7 = vector.load %arg2[%6, %c0_5, %c0_6] : memref<8x8x128xf32, #tpu.memory_space<vmem>>, vector<1x8x128xf32>
    %8 = vector.shape_cast %7 : vector<1x8x128xf32> to vector<8x128xf32>
    %9 = arith.addf %8, %5 : vector<8x128xf32>
    %10 = math.tanh %9 : vector<8x128xf32>
    %c1_i32 = arith.constant 1 : i32
    %cst_7 = arith.constant dense<0.000000e+00> : vector<8x128xf32>
    %11 = tpu.matmul %10, %3, %cst_7 {dimension_numbers = #tpu.dot_dimension_numbers<[1], [0], [0], [1], [0, 0, 1, 1], [], []>} : vector<8x128xf32>, vector<128x128xf32>, vector<8x128xf32> -> vector<8x128xf32>
    %12 = arith.index_cast %c1_i32 : i32 to index
    %c0_8 = arith.constant 0 : index
    %c0_9 = arith.constant 0 : index
    %13 = vector.load %arg2[%12, %c0_8, %c0_9] : memref<8x8x128xf32, #tpu.memory_space<vmem>>, vector<1x8x128xf32>
    %14 = vector.shape_cast %13 : vector<1x8x128xf32> to vector<8x128xf32>
    %15 = arith.addf %14, %11 : vector<8x128xf32>
    %16 = math.tanh %15 : vector<8x128xf32>
    %c2_i32 = arith.constant 2 : i32
    %cst_10 = arith.constant dense<0.000000e+00> : vector<8x128xf32>
    %17 = tpu.matmul %16, %3, %cst_10 {dimension_numbers = #tpu.dot_dimension_numbers<[1], [0], [0], [1], [0, 0, 1, 1], [], []>} : vector<8x128xf32>, vector<128x128xf32>, vector<8x128xf32> -> vector<8x128xf32>
    %18 = arith.index_cast %c2_i32 : i32 to index
    %c0_11 = arith.constant 0 : index
    %c0_12 = arith.constant 0 : index
    %19 = vector.load %arg2[%18, %c0_11, %c0_12] : memref<8x8x128xf32, #tpu.memory_space<vmem>>, vector<1x8x128xf32>
    %20 = vector.shape_cast %19 : vector<1x8x128xf32> to vector<8x128xf32>
    %21 = arith.addf %20, %17 : vector<8x128xf32>
    %22 = math.tanh %21 : vector<8x128xf32>
    %c3_i32 = arith.constant 3 : i32
    %cst_13 = arith.constant dense<0.000000e+00> : vector<8x128xf32>
    %23 = tpu.matmul %22, %3, %cst_13 {dimension_numbers = #tpu.dot_dimension_numbers<[1], [0], [0], [1], [0, 0, 1, 1], [], []>} : vector<8x128xf32>, vector<128x128xf32>, vector<8x128xf32> -> vector<8x128xf32>
    %24 = arith.index_cast %c3_i32 : i32 to index
    %c0_14 = arith.constant 0 : index
    %c0_15 = arith.constant 0 : index
    %25 = vector.load %arg2[%24, %c0_14, %c0_15] : memref<8x8x128xf32, #tpu.memory_space<vmem>>, vector<1x8x128xf32>
    %26 = vector.shape_cast %25 : vector<1x8x128xf32> to vector<8x128xf32>
    %27 = arith.addf %26, %23 : vector<8x128xf32>
    %28 = math.tanh %27 : vector<8x128xf32>
    %c4_i32 = arith.constant 4 : i32
    %cst_16 = arith.constant dense<0.000000e+00> : vector<8x128xf32>
    %29 = tpu.matmul %28, %3, %cst_16 {dimension_numbers = #tpu.dot_dimension_numbers<[1], [0], [0], [1], [0, 0, 1, 1], [], []>} : vector<8x128xf32>, vector<128x128xf32>, vector<8x128xf32> -> vector<8x128xf32>
    %30 = arith.index_cast %c4_i32 : i32 to index
    %c0_17 = arith.constant 0 : index
    %c0_18 = arith.constant 0 : index
    %31 = vector.load %arg2[%30, %c0_17, %c0_18] : memref<8x8x128xf32, #tpu.memory_space<vmem>>, vector<1x8x128xf32>
    %32 = vector.shape_cast %31 : vector<1x8x128xf32> to vector<8x128xf32>
    %33 = arith.addf %32, %29 : vector<8x128xf32>
    %34 = math.tanh %33 : vector<8x128xf32>
    %c5_i32 = arith.constant 5 : i32
    %cst_19 = arith.constant dense<0.000000e+00> : vector<8x128xf32>
    %35 = tpu.matmul %34, %3, %cst_19 {dimension_numbers = #tpu.dot_dimension_numbers<[1], [0], [0], [1], [0, 0, 1, 1], [], []>} : vector<8x128xf32>, vector<128x128xf32>, vector<8x128xf32> -> vector<8x128xf32>
    %36 = arith.index_cast %c5_i32 : i32 to index
    %c0_20 = arith.constant 0 : index
    %c0_21 = arith.constant 0 : index
    %37 = vector.load %arg2[%36, %c0_20, %c0_21] : memref<8x8x128xf32, #tpu.memory_space<vmem>>, vector<1x8x128xf32>
    %38 = vector.shape_cast %37 : vector<1x8x128xf32> to vector<8x128xf32>
    %39 = arith.addf %38, %35 : vector<8x128xf32>
    %40 = math.tanh %39 : vector<8x128xf32>
    %c6_i32 = arith.constant 6 : i32
    %cst_22 = arith.constant dense<0.000000e+00> : vector<8x128xf32>
    %41 = tpu.matmul %40, %3, %cst_22 {dimension_numbers = #tpu.dot_dimension_numbers<[1], [0], [0], [1], [0, 0, 1, 1], [], []>} : vector<8x128xf32>, vector<128x128xf32>, vector<8x128xf32> -> vector<8x128xf32>
    %42 = arith.index_cast %c6_i32 : i32 to index
    %c0_23 = arith.constant 0 : index
    %c0_24 = arith.constant 0 : index
    %43 = vector.load %arg2[%42, %c0_23, %c0_24] : memref<8x8x128xf32, #tpu.memory_space<vmem>>, vector<1x8x128xf32>
    %44 = vector.shape_cast %43 : vector<1x8x128xf32> to vector<8x128xf32>
    %45 = arith.addf %44, %41 : vector<8x128xf32>
    %46 = math.tanh %45 : vector<8x128xf32>
    %c7_i32 = arith.constant 7 : i32
    %cst_25 = arith.constant dense<0.000000e+00> : vector<8x128xf32>
    %47 = tpu.matmul %46, %3, %cst_25 {dimension_numbers = #tpu.dot_dimension_numbers<[1], [0], [0], [1], [0, 0, 1, 1], [], []>} : vector<8x128xf32>, vector<128x128xf32>, vector<8x128xf32> -> vector<8x128xf32>
    %48 = arith.index_cast %c7_i32 : i32 to index
    %c0_26 = arith.constant 0 : index
    %c0_27 = arith.constant 0 : index
    %49 = vector.load %arg2[%48, %c0_26, %c0_27] : memref<8x8x128xf32, #tpu.memory_space<vmem>>, vector<1x8x128xf32>
    %50 = vector.shape_cast %49 : vector<1x8x128xf32> to vector<8x128xf32>
    %51 = arith.addf %50, %47 : vector<8x128xf32>
    %52 = math.tanh %51 : vector<8x128xf32>
    %c8_i32 = arith.constant 8 : i32
    %c0_28 = arith.constant 0 : index
    %c0_29 = arith.constant 0 : index
    %53 = vector.load %arg5[%c0_28, %c0_29] : memref<8x128xf32, #tpu.memory_space<vmem>>, vector<8x128xf32>
    tpu.vector_store %arg5[%c0_28, %c0_29], %52 {strides = array<i32>} : memref<8x128xf32, #tpu.memory_space<vmem>>, vector<8x128xf32>,
    %c0_i32_30 = arith.constant 0 : i32
    %54 = arith.cmpi eq, %arg1, %c0_i32_30 : i32
    %55 = arith.extui %54 : i1 to i32
    %c0_i32_31 = arith.constant 0 : i32
    %56 = arith.cmpi ne, %55, %c0_i32_31 : i32
    scf.if %56 {
      %c0_32 = arith.constant 0 : index
      %c0_33 = arith.constant 0 : index
      %57 = vector.load %arg4[%c0_32, %c0_33] : memref<8x128xf32, #tpu.memory_space<vmem>>, vector<8x128xf32>
      tpu.vector_store %arg4[%c0_32, %c0_33], %52 {strides = array<i32>} : memref<8x128xf32, #tpu.memory_space<vmem>>, vector<8x128xf32>,
    } else {
    }
    return
  }
  func.func @transform_0(%arg0: i32, %arg1: i32) -> (i32, i32, i32) {
    %c0_i32 = arith.constant 0 : i32
    %c0_i32_0 = arith.constant 0 : i32
    return %arg1, %arg0, %c0_i32 : i32, i32, i32
  }
  func.func @transform_1(%arg0: i32, %arg1: i32) -> (i32, i32) {
    %c0_i32 = arith.constant 0 : i32
    %c0_i32_0 = arith.constant 0 : i32
    %c0_i32_1 = arith.constant 0 : i32
    return %c0_i32, %c0_i32_0 : i32, i32
  }
  func.func @transform_2(%arg0: i32, %arg1: i32) -> (i32, i32) {
    %c0_i32 = arith.constant 0 : i32
    %c0_i32_0 = arith.constant 0 : i32
    return %arg0, %c0_i32 : i32, i32
  }
}

</mosaic_0001>

<llo_original>
// kernel: rnn_forward.1
$region0: #{rnn_forward.1}
  #allocation0 [shape = 'u32[]', space=smem, size = 0x4, offset = 0x4, fixed_abs, tag = 'smem constant byte address 0x4 - core index']
  #allocation1 [shape = 'u32[144,128]{1,0:T(1,128)}', space=vmem, size = 0x12000, scoped, tag = 'internal scratch']
  #allocation2 [shape = 'f32[8,128]{1,0:T(8,128)}', space=vmem, size = 0x1000, scoped, tag = 'scratch operand']
  %s0 = inlined_call_operand.vmem [shape: f32[8,8,128], index: 0, kind: input, shape index: {}]
  %s1 = inlined_call_operand.vmem [shape: f32[128,128], index: 1, kind: input, shape index: {}]
  %s2 = inlined_call_operand.vmem [shape: f32[8,128], index: 2, kind: output, shape index: {}]
  %s3 = sld [smem:[#allocation0]]
  $region26: #{rnn_forward.1} parent=0
    _
  %s5 = ssub.s32 1, %s3
  %s6 = scalar_select 0, %s5, %s3
  // Predicated region
  $region2: #{rnn_forward.1} parent=0 // pred_check
    _
  $region3: #{rnn_forward.1} parent=0 // pred_check_branch
    %8 = sbr.rel (0) target = $region5
  $region4: #{rnn_forward.1} parent=0 // pred_region
    _
  $region5: #{rnn_forward.1} parent=0 // pred_fallthru
    _
  // Predicated region
  $region6: #{rnn_forward.1} parent=0 // pred_check
    _
  $region7: #{rnn_forward.1} parent=0 // pred_check_branch
    %10 = sbr.rel (0) target = $region9
  $region8: #{rnn_forward.1} parent=0 // pred_region
    _
  $region9: #{rnn_forward.1} parent=0 // pred_fallthru
    _
  %p11 = scmp.eq.s32.totalorder 0, 0
  // Predicated region
  $region10: #{rnn_forward.1} parent=0 // pred_check
    %p12 = pneg %p11
  $region11: #{rnn_forward.1} parent=0 // pred_check_branch
    %14 = sbr.rel (%p12) target = $region13
  $region12: #{rnn_forward.1} parent=0 // pred_region
    %15 = vst [vmem:[#allocation2] sm:$0xff] 0.0
  $region13: #{rnn_forward.1} parent=0 // pred_fallthru
    _
  %v16 = vld [vmem:[%s1] sm:$0xff]
  %v17 = vld [vmem:[%s1 + $0x8] sm:$0xff]
  %v18 = vld [vmem:[%s1 + $0x10] sm:$0xff]
  %v19 = vld [vmem:[%s1 + $0x18] sm:$0xff]
  %v20 = vld [vmem:[%s1 + $0x20] sm:$0xff]
  %v21 = vld [vmem:[%s1 + $0x28] sm:$0xff]
  %v22 = vld [vmem:[%s1 + $0x30] sm:$0xff]
  %v23 = vld [vmem:[%s1 + $0x38] sm:$0xff]
  %v24 = vld [vmem:[%s1 + $0x40] sm:$0xff]
  %v25 = vld [vmem:[%s1 + $0x48] sm:$0xff]
  %v26 = vld [vmem:[%s1 + $0x50] sm:$0xff]
  %v27 = vld [vmem:[%s1 + $0x58] sm:$0xff]
  %v28 = vld [vmem:[%s1 + $0x60] sm:$0xff]
  %v29 = vld [vmem:[%s1 + $0x68] sm:$0xff]
  %v30 = vld [vmem:[%s1 + $0x70] sm:$0xff]
  %v31 = vld [vmem:[%s1 + $0x78] sm:$0xff]
  %v32 = vld [vmem:[#allocation2] sm:$0xff]
  %33 = vmatprep.subr.mxu0 0.0
  %34 = vmatpush1.msra.mxu0 %v16
  %35 = vmatprep.subr.mxu0 0.0
  %36 = vmatpush1.msra.mxu0 %v17
  %37 = vmatprep.subr.mxu0 0.0
  %38 = vmatpush1.msra.mxu0 %v18
  %39 = vmatprep.subr.mxu0 0.0
  %40 = vmatpush1.msra.mxu0 %v19
  %41 = vmatprep.subr.mxu0 0.0
  %42 = vmatpush1.msra.mxu0 %v20
  %43 = vmatprep.subr.mxu0 0.0
  %44 = vmatpush1.msra.mxu0 %v21
  %45 = vmatprep.subr.mxu0 0.0
  %46 = vmatpush1.msra.mxu0 %v22
  %47 = vmatprep.subr.mxu0 0.0
  %48 = vmatpush1.msra.mxu0 %v23
  %49 = vmatprep.subr.mxu0 0.0
  %50 = vmatpush1.msra.mxu0 %v24
  %51 = vmatprep.subr.mxu0 0.0
  %52 = vmatpush1.msra.mxu0 %v25
  %53 = vmatprep.subr.mxu0 0.0
  %54 = vmatpush1.msra.mxu0 %v26
  %55 = vmatprep.subr.mxu0 0.0
  %56 = vmatpush1.msra.mxu0 %v27
  %57 = vmatprep.subr.mxu0 0.0
  %58 = vmatpush1.msra.mxu0 %v28
  %59 = vmatprep.subr.mxu0 0.0
  %60 = vmatpush1.msra.mxu0 %v29
  %61 = vmatprep.subr.mxu0 0.0
  %62 = vmatpush1.msra.mxu0 %v30
  %63 = vmatprep.subr.mxu0 0.0
  %64 = vmatpush1.msra.mxu0 %v31
  %65 = vmatprep.subr.mxu0 0.0
  %66 = vmatpush1.msra.mxu0 0.0
  %67 = vmatprep.subr.mxu0 0.0
  %68 = vmatpush1.msra.mxu0 0.0
  %69 = vmatprep.subr.mxu0 0.0
  %70 = vmatpush1.msra.mxu0 0.0
  %71 = vmatprep.subr.mxu0 0.0
  %72 = vmatpush1.msra.mxu0 0.0
  %73 = vmatprep.subr.mxu0 0.0
  %74 = vmatpush1.msra.mxu0 0.0
  %75 = vmatprep.subr.mxu0 0.0
  %76 = vmatpush1.msra.mxu0 0.0
  %77 = vmatprep.subr.mxu0 0.0
  %78 = vmatpush1.msra.mxu0 0.0
  %79 = vmatprep.subr.mxu0 0.0
  %80 = vmatpush1.msra.mxu0 0.0
  %81 = vmatprep.subr.mxu0 0.0
  %82 = vmatpush1.msra.mxu0 0.0
  %83 = vmatprep.subr.mxu0 0.0
  %84 = vmatpush1.msra.mxu0 0.0
  %85 = vmatprep.subr.mxu0 0.0
  %86 = vmatpush1.msra.mxu0 0.0
  %87 = vmatprep.subr.mxu0 0.0
  %88 = vmatpush1.msra.mxu0 0.0
  %89 = vmatprep.subr.mxu0 0.0
  %90 = vmatpush1.msra.mxu0 0.0
  %91 = vmatprep.subr.mxu0 0.0
  %92 = vmatpush1.msra.mxu0 0.0
  %93 = vmatprep.subr.mxu0 0.0
  %94 = vmatpush1.msra.mxu0 0.0
  %95 = vmatprep.subr.mxu0 0.0
  %96 = vmatpush1.msra.mxu0 0.0
  %97 = vmatprep.mubr.f32.mxu0 0.0
  %98 = vmatmul.mubr.f32.gmra.mrb[0].mxu0 %v32
  %v99 = vpop.f32.mrb[0].mxu0
  %v100 = vadd.f32 0.0, %v99
  %v101 = vpop.f32.mrb[0].mxu0
  %102 = vdwg.mxu0
  %v103 = vld [vmem:[%s0] sm:$0xff]
  %v104 = vadd.f32 %v103, %v100
  %v105 = vtanh.pop %v104
  %106 = vmatprep.subr.mxu0 0.0
  %107 = vmatpush1.msra.mxu0 %v16
  %108 = vmatprep.subr.mxu0 0.0
  %109 = vmatpush1.msra.mxu0 %v17
  %110 = vmatprep.subr.mxu0 0.0
  %111 = vmatpush1.msra.mxu0 %v18
  %112 = vmatprep.subr.mxu0 0.0
  %113 = vmatpush1.msra.mxu0 %v19
  %114 = vmatprep.subr.mxu0 0.0
  %115 = vmatpush1.msra.mxu0 %v20
  %116 = vmatprep.subr.mxu0 0.0
  %117 = vmatpush1.msra.mxu0 %v21
  %118 = vmatprep.subr.mxu0 0.0
  %119 = vmatpush1.msra.mxu0 %v22
  %120 = vmatprep.subr.mxu0 0.0
  %121 = vmatpush1.msra.mxu0 %v23
  %122 = vmatprep.subr.mxu0 0.0
  %123 = vmatpush1.msra.mxu0 %v24
  %124 = vmatprep.subr.mxu0 0.0
  %125 = vmatpush1.msra.mxu0 %v25
  %126 = vmatprep.subr.mxu0 0.0
  %127 = vmatpush1.msra.mxu0 %v26
  %128 = vmatprep.subr.mxu0 0.0
  %129 = vmatpush1.msra.mxu0 %v27
  %130 = vmatprep.subr.mxu0 0.0
  %131 = vmatpush1.msra.mxu0 %v28
  %132 = vmatprep.subr.mxu0 0.0
  %133 = vmatpush1.msra.mxu0 %v29
  %134 = vmatprep.subr.mxu0 0.0
  %135 = vmatpush1.msra.mxu0 %v30
  %136 = vmatprep.subr.mxu0 0.0
  %137 = vmatpush1.msra.mxu0 %v31
  %138 = vmatprep.subr.mxu0 0.0
  %139 = vmatpush1.msra.mxu0 0.0
  %140 = vmatprep.subr.mxu0 0.0
  %141 = vmatpush1.msra.mxu0 0.0
  %142 = vmatprep.subr.mxu0 0.0
  %143 = vmatpush1.msra.mxu0 0.0
  %144 = vmatprep.subr.mxu0 0.0
  %145 = vmatpush1.msra.mxu0 0.0
  %146 = vmatprep.subr.mxu0 0.0
  %147 = vmatpush1.msra.mxu0 0.0
  %148 = vmatprep.subr.mxu0 0.0
  %149 = vmatpush1.msra.mxu0 0.0
  %150 = vmatprep.subr.mxu0 0.0
  %151 = vmatpush1.msra.mxu0 0.0
  %152 = vmatprep.subr.mxu0 0.0
  %153 = vmatpush1.msra.mxu0 0.0
  %154 = vmatprep.subr.mxu0 0.0
  %155 = vmatpush1.msra.mxu0 0.0
  %156 = vmatprep.subr.mxu0 0.0
  %157 = vmatpush1.msra.mxu0 0.0
  %158 = vmatprep.subr.mxu0 0.0
  %159 = vmatpush1.msra.mxu0 0.0
  %160 = vmatprep.subr.mxu0 0.0
  %161 = vmatpush1.msra.mxu0 0.0
  %162 = vmatprep.subr.mxu0 0.0
  %163 = vmatpush1.msra.mxu0 0.0
  %164 = vmatprep.subr.mxu0 0.0
  %165 = vmatpush1.msra.mxu0 0.0
  %166 = vmatprep.subr.mxu0 0.0
  %167 = vmatpush1.msra.mxu0 0.0
  %168 = vmatprep.subr.mxu0 0.0
  %169 = vmatpush1.msra.mxu0 0.0
  %170 = vmatprep.mubr.f32.mxu0 0.0
  %171 = vmatmul.mubr.f32.gmra.mrb[0].mxu0 %v105
  %v172 = vpop.f32.mrb[0].mxu0
  %v173 = vadd.f32 0.0, %v172
  %v174 = vpop.f32.mrb[0].mxu0
  %175 = vdwg.mxu0
  %s176 = scalar_lea.vmem %s0, 8
  %v177 = vld [vmem:[%s176] sm:$0xff]
  %v178 = vadd.f32 %v177, %v173
  %v179 = vtanh.pop %v178
  %180 = vmatprep.subr.mxu0 0.0
  %181 = vmatpush1.msra.mxu0 %v16
  %182 = vmatprep.subr.mxu0 0.0
  %183 = vmatpush1.msra.mxu0 %v17
  %184 = vmatprep.subr.mxu0 0.0
  %185 = vmatpush1.msra.mxu0 %v18
  %186 = vmatprep.subr.mxu0 0.0
  %187 = vmatpush1.msra.mxu0 %v19
  %188 = vmatprep.subr.mxu0 0.0
  %189 = vmatpush1.msra.mxu0 %v20
  %190 = vmatprep.subr.mxu0 0.0
  %191 = vmatpush1.msra.mxu0 %v21
  %192 = vmatprep.subr.mxu0 0.0
  %193 = vmatpush1.msra.mxu0 %v22
  %194 = vmatprep.subr.mxu0 0.0
  %195 = vmatpush1.msra.mxu0 %v23
  %196 = vmatprep.subr.mxu0 0.0
  %197 = vmatpush1.msra.mxu0 %v24
  %198 = vmatprep.subr.mxu0 0.0
  %199 = vmatpush1.msra.mxu0 %v25
  %200 = vmatprep.subr.mxu0 0.0
  %201 = vmatpush1.msra.mxu0 %v26
  %202 = vmatprep.subr.mxu0 0.0
  %203 = vmatpush1.msra.mxu0 %v27
  %204 = vmatprep.subr.mxu0 0.0
  %205 = vmatpush1.msra.mxu0 %v28
  %206 = vmatprep.subr.mxu0 0.0
  %207 = vmatpush1.msra.mxu0 %v29
  %208 = vmatprep.subr.mxu0 0.0
  %209 = vmatpush1.msra.mxu0 %v30
  %210 = vmatprep.subr.mxu0 0.0
  %211 = vmatpush1.msra.mxu0 %v31
  %212 = vmatprep.subr.mxu0 0.0
  %213 = vmatpush1.msra.mxu0 0.0
  %214 = vmatprep.subr.mxu0 0.0
  %215 = vmatpush1.msra.mxu0 0.0
  %216 = vmatprep.subr.mxu0 0.0
  %217 = vmatpush1.msra.mxu0 0.0
  %218 = vmatprep.subr.mxu0 0.0
  %219 = vmatpush1.msra.mxu0 0.0
  %220 = vmatprep.subr.mxu0 0.0
  %221 = vmatpush1.msra.mxu0 0.0
  %222 = vmatprep.subr.mxu0 0.0
  %223 = vmatpush1.msra.mxu0 0.0
  %224 = vmatprep.subr.mxu0 0.0
  %225 = vmatpush1.msra.mxu0 0.0
  %226 = vmatprep.subr.mxu0 0.0
  %227 = vmatpush1.msra.mxu0 0.0
  %228 = vmatprep.subr.mxu0 0.0
  %229 = vmatpush1.msra.mxu0 0.0
  %230 = vmatprep.subr.mxu0 0.0
  %231 = vmatpush1.msra.mxu0 0.0
  %232 = vmatprep.subr.mxu0 0.0
  %233 = vmatpush1.msra.mxu0 0.0
  %234 = vmatprep.subr.mxu0 0.0
  %235 = vmatpush1.msra.mxu0 0.0
  %236 = vmatprep.subr.mxu0 0.0
  %237 = vmatpush1.msra.mxu0 0.0
  %238 = vmatprep.subr.mxu0 0.0
  %239 = vmatpush1.msra.mxu0 0.0
  %240 = vmatprep.subr.mxu0 0.0
  %241 = vmatpush1.msra.mxu0 0.0
  %242 = vmatprep.subr.mxu0 0.0
  %243 = vmatpush1.msra.mxu0 0.0
  %244 = vmatprep.mubr.f32.mxu0 0.0
  %245 = vmatmul.mubr.f32.gmra.mrb[0].mxu0 %v179
  %v246 = vpop.f32.mrb[0].mxu0
  %v247 = vadd.f32 0.0, %v246
  %v248 = vpop.f32.mrb[0].mxu0
  %249 = vdwg.mxu0
  %s250 = scalar_lea.vmem %s0, 16
  %v251 = vld [vmem:[%s250] sm:$0xff]
  %v252 = vadd.f32 %v251, %v247
  %v253 = vtanh.pop %v252
  %254 = vmatprep.subr.mxu0 0.0
  %255 = vmatpush1.msra.mxu0 %v16
  %256 = vmatprep.subr.mxu0 0.0
  %257 = vmatpush1.msra.mxu0 %v17
  %258 = vmatprep.subr.mxu0 0.0
  %259 = vmatpush1.msra.mxu0 %v18
  %260 = vmatprep.subr.mxu0 0.0
  %261 = vmatpush1.msra.mxu0 %v19
  %262 = vmatprep.subr.mxu0 0.0
  %263 = vmatpush1.msra.mxu0 %v20
  %264 = vmatprep.subr.mxu0 0.0
  %265 = vmatpush1.msra.mxu0 %v21
  %266 = vmatprep.subr.mxu0 0.0
  %267 = vmatpush1.msra.mxu0 %v22
  %268 = vmatprep.subr.mxu0 0.0
  %269 = vmatpush1.msra.mxu0 %v23
  %270 = vmatprep.subr.mxu0 0.0
  %271 = vmatpush1.msra.mxu0 %v24
  %272 = vmatprep.subr.mxu0 0.0
  %273 = vmatpush1.msra.mxu0 %v25
  %274 = vmatprep.subr.mxu0 0.0
  %275 = vmatpush1.msra.mxu0 %v26
  %276 = vmatprep.subr.mxu0 0.0
  %277 = vmatpush1.msra.mxu0 %v27
  %278 = vmatprep.subr.mxu0 0.0
  %279 = vmatpush1.msra.mxu0 %v28
  %280 = vmatprep.subr.mxu0 0.0
  %281 = vmatpush1.msra.mxu0 %v29
  %282 = vmatprep.subr.mxu0 0.0
  %283 = vmatpush1.msra.mxu0 %v30
  %284 = vmatprep.subr.mxu0 0.0
  %285 = vmatpush1.msra.mxu0 %v31
  %286 = vmatprep.subr.mxu0 0.0
  %287 = vmatpush1.msra.mxu0 0.0
  %288 = vmatprep.subr.mxu0 0.0
  %289 = vmatpush1.msra.mxu0 0.0
  %290 = vmatprep.subr.mxu0 0.0
  %291 = vmatpush1.msra.mxu0 0.0
  %292 = vmatprep.subr.mxu0 0.0
  %293 = vmatpush1.msra.mxu0 0.0
  %294 = vmatprep.subr.mxu0 0.0
  %295 = vmatpush1.msra.mxu0 0.0
  %296 = vmatprep.subr.mxu0 0.0
  %297 = vmatpush1.msra.mxu0 0.0
  %298 = vmatprep.subr.mxu0 0.0
  %299 = vmatpush1.msra.mxu0 0.0
  %300 = vmatprep.subr.mxu0 0.0
  %301 = vmatpush1.msra.mxu0 0.0
  %302 = vmatprep.subr.mxu0 0.0
  %303 = vmatpush1.msra.mxu0 0.0
  %304 = vmatprep.subr.mxu0 0.0
  %305 = vmatpush1.msra.mxu0 0.0
  %306 = vmatprep.subr.mxu0 0.0
  %307 = vmatpush1.msra.mxu0 0.0
  %308 = vmatprep.subr.mxu0 0.0
  %309 = vmatpush1.msra.mxu0 0.0
  %310 = vmatprep.subr.mxu0 0.0
  %311 = vmatpush1.msra.mxu0 0.0
  %312 = vmatprep.subr.mxu0 0.0
  %313 = vmatpush1.msra.mxu0 0.0
  %314 = vmatprep.subr.mxu0 0.0
  %315 = vmatpush1.msra.mxu0 0.0
  %316 = vmatprep.subr.mxu0 0.0
  %317 = vmatpush1.msra.mxu0 0.0
  %318 = vmatprep.mubr.f32.mxu0 0.0
  %319 = vmatmul.mubr.f32.gmra.mrb[0].mxu0 %v253
  %v320 = vpop.f32.mrb[0].mxu0
  %v321 = vadd.f32 0.0, %v320
  %v322 = vpop.f32.mrb[0].mxu0
  %323 = vdwg.mxu0
  %s324 = scalar_lea.vmem %s0, 24
  %v325 = vld [vmem:[%s324] sm:$0xff]
  %v326 = vadd.f32 %v325, %v321
  %v327 = vtanh.pop %v326
  %328 = vmatprep.subr.mxu0 0.0
  %329 = vmatpush1.msra.mxu0 %v16
  %330 = vmatprep.subr.mxu0 0.0
  %331 = vmatpush1.msra.mxu0 %v17
  %332 = vmatprep.subr.mxu0 0.0
  %333 = vmatpush1.msra.mxu0 %v18
  %334 = vmatprep.subr.mxu0 0.0
  %335 = vmatpush1.msra.mxu0 %v19
  %336 = vmatprep.subr.mxu0 0.0
  %337 = vmatpush1.msra.mxu0 %v20
  %338 = vmatprep.subr.mxu0 0.0
  %339 = vmatpush1.msra.mxu0 %v21
  %340 = vmatprep.subr.mxu0 0.0
  %341 = vmatpush1.msra.mxu0 %v22
  %342 = vmatprep.subr.mxu0 0.0
  %343 = vmatpush1.msra.mxu0 %v23
  %344 = vmatprep.subr.mxu0 0.0
  %345 = vmatpush1.msra.mxu0 %v24
  %346 = vmatprep.subr.mxu0 0.0
  %347 = vmatpush1.msra.mxu0 %v25
  %348 = vmatprep.subr.mxu0 0.0
  %349 = vmatpush1.msra.mxu0 %v26
  %350 = vmatprep.subr.mxu0 0.0
  %351 = vmatpush1.msra.mxu0 %v27
  %352 = vmatprep.subr.mxu0 0.0
  %353 = vmatpush1.msra.mxu0 %v28
  %354 = vmatprep.subr.mxu0 0.0
  %355 = vmatpush1.msra.mxu0 %v29
  %356 = vmatprep.subr.mxu0 0.0
  %357 = vmatpush1.msra.mxu0 %v30
  %358 = vmatprep.subr.mxu0 0.0
  %359 = vmatpush1.msra.mxu0 %v31
  %360 = vmatprep.subr.mxu0 0.0
  %361 = vmatpush1.msra.mxu0 0.0
  %362 = vmatprep.subr.mxu0 0.0
  %363 = vmatpush1.msra.mxu0 0.0
  %364 = vmatprep.subr.mxu0 0.0
  %365 = vmatpush1.msra.mxu0 0.0
  %366 = vmatprep.subr.mxu0 0.0
  %367 = vmatpush1.msra.mxu0 0.0
  %368 = vmatprep.subr.mxu0 0.0
  %369 = vmatpush1.msra.mxu0 0.0
  %370 = vmatprep.subr.mxu0 0.0
  %371 = vmatpush1.msra.mxu0 0.0
  %372 = vmatprep.subr.mxu0 0.0
  %373 = vmatpush1.msra.mxu0 0.0
  %374 = vmatprep.subr.mxu0 0.0
  %375 = vmatpush1.msra.mxu0 0.0
  %376 = vmatprep.subr.mxu0 0.0
  %377 = vmatpush1.msra.mxu0 0.0
  %378 = vmatprep.subr.mxu0 0.0
  %379 = vmatpush1.msra.mxu0 0.0
  %380 = vmatprep.subr.mxu0 0.0
  %381 = vmatpush1.msra.mxu0 0.0
  %382 = vmatprep.subr.mxu0 0.0
  %383 = vmatpush1.msra.mxu0 0.0
  %384 = vmatprep.subr.mxu0 0.0
  %385 = vmatpush1.msra.mxu0 0.0
  %386 = vmatprep.subr.mxu0 0.0
  %387 = vmatpush1.msra.mxu0 0.0
  %388 = vmatprep.subr.mxu0 0.0
  %389 = vmatpush1.msra.mxu0 0.0
  %390 = vmatprep.subr.mxu0 0.0
  %391 = vmatpush1.msra.mxu0 0.0
  %392 = vmatprep.mubr.f32.mxu0 0.0
  %393 = vmatmul.mubr.f32.gmra.mrb[0].mxu0 %v327
  %v394 = vpop.f32.mrb[0].mxu0
  %v395 = vadd.f32 0.0, %v394
  %v396 = vpop.f32.mrb[0].mxu0
  %397 = vdwg.mxu0
  %s398 = scalar_lea.vmem %s0, 32
  %v399 = vld [vmem:[%s398] sm:$0xff]
  %v400 = vadd.f32 %v399, %v395
  %v401 = vtanh.pop %v400
  %402 = vmatprep.subr.mxu0 0.0
  %403 = vmatpush1.msra.mxu0 %v16
  %404 = vmatprep.subr.mxu0 0.0
  %405 = vmatpush1.msra.mxu0 %v17
  %406 = vmatprep.subr.mxu0 0.0
  %407 = vmatpush1.msra.mxu0 %v18
  %408 = vmatprep.subr.mxu0 0.0
  %409 = vmatpush1.msra.mxu0 %v19
  %410 = vmatprep.subr.mxu0 0.0
  %411 = vmatpush1.msra.mxu0 %v20
  %412 = vmatprep.subr.mxu0 0.0
  %413 = vmatpush1.msra.mxu0 %v21
  %414 = vmatprep.subr.mxu0 0.0
  %415 = vmatpush1.msra.mxu0 %v22
  %416 = vmatprep.subr.mxu0 0.0
  %417 = vmatpush1.msra.mxu0 %v23
  %418 = vmatprep.subr.mxu0 0.0
  %419 = vmatpush1.msra.mxu0 %v24
  %420 = vmatprep.subr.mxu0 0.0
  %421 = vmatpush1.msra.mxu0 %v25
  %422 = vmatprep.subr.mxu0 0.0
  %423 = vmatpush1.msra.mxu0 %v26
  %424 = vmatprep.subr.mxu0 0.0
  %425 = vmatpush1.msra.mxu0 %v27
  %426 = vmatprep.subr.mxu0 0.0
  %427 = vmatpush1.msra.mxu0 %v28
  %428 = vmatprep.subr.mxu0 0.0
  %429 = vmatpush1.msra.mxu0 %v29
  %430 = vmatprep.subr.mxu0 0.0
  %431 = vmatpush1.msra.mxu0 %v30
  %432 = vmatprep.subr.mxu0 0.0
  %433 = vmatpush1.msra.mxu0 %v31
  %434 = vmatprep.subr.mxu0 0.0
  %435 = vmatpush1.msra.mxu0 0.0
  %436 = vmatprep.subr.mxu0 0.0
  %437 = vmatpush1.msra.mxu0 0.0
  %438 = vmatprep.subr.mxu0 0.0
  %439 = vmatpush1.msra.mxu0 0.0
  %440 = vmatprep.subr.mxu0 0.0
  %441 = vmatpush1.msra.mxu0 0.0
  %442 = vmatprep.subr.mxu0 0.0
  %443 = vmatpush1.msra.mxu0 0.0
  %444 = vmatprep.subr.mxu0 0.0
  %445 = vmatpush1.msra.mxu0 0.0
  %446 = vmatprep.subr.mxu0 0.0
  %447 = vmatpush1.msra.mxu0 0.0
  %448 = vmatprep.subr.mxu0 0.0
  %449 = vmatpush1.msra.mxu0 0.0
  %450 = vmatprep.subr.mxu0 0.0
  %451 = vmatpush1.msra.mxu0 0.0
  %452 = vmatprep.subr.mxu0 0.0
  %453 = vmatpush1.msra.mxu0 0.0
  %454 = vmatprep.subr.mxu0 0.0
  %455 = vmatpush1.msra.mxu0 0.0
  %456 = vmatprep.subr.mxu0 0.0
  %457 = vmatpush1.msra.mxu0 0.0
  %458 = vmatprep.subr.mxu0 0.0
  %459 = vmatpush1.msra.mxu0 0.0
  %460 = vmatprep.subr.mxu0 0.0
  %461 = vmatpush1.msra.mxu0 0.0
  %462 = vmatprep.subr.mxu0 0.0
  %463 = vmatpush1.msra.mxu0 0.0
  %464 = vmatprep.subr.mxu0 0.0
  %465 = vmatpush1.msra.mxu0 0.0
  %466 = vmatprep.mubr.f32.mxu0 0.0
  %467 = vmatmul.mubr.f32.gmra.mrb[0].mxu0 %v401
  %v468 = vpop.f32.mrb[0].mxu0
  %v469 = vadd.f32 0.0, %v468
  %v470 = vpop.f32.mrb[0].mxu0
  %471 = vdwg.mxu0
  %s472 = scalar_lea.vmem %s0, 40
  %v473 = vld [vmem:[%s472] sm:$0xff]
  %v474 = vadd.f32 %v473, %v469
  %v475 = vtanh.pop %v474
  %476 = vmatprep.subr.mxu0 0.0
  %477 = vmatpush1.msra.mxu0 %v16
  %478 = vmatprep.subr.mxu0 0.0
  %479 = vmatpush1.msra.mxu0 %v17
  %480 = vmatprep.subr.mxu0 0.0
  %481 = vmatpush1.msra.mxu0 %v18
  %482 = vmatprep.subr.mxu0 0.0
  %483 = vmatpush1.msra.mxu0 %v19
  %484 = vmatprep.subr.mxu0 0.0
  %485 = vmatpush1.msra.mxu0 %v20
  %486 = vmatprep.subr.mxu0 0.0
  %487 = vmatpush1.msra.mxu0 %v21
  %488 = vmatprep.subr.mxu0 0.0
  %489 = vmatpush1.msra.mxu0 %v22
  %490 = vmatprep.subr.mxu0 0.0
  %491 = vmatpush1.msra.mxu0 %v23
  %492 = vmatprep.subr.mxu0 0.0
  %493 = vmatpush1.msra.mxu0 %v24
  %494 = vmatprep.subr.mxu0 0.0
  %495 = vmatpush1.msra.mxu0 %v25
  %496 = vmatprep.subr.mxu0 0.0
  %497 = vmatpush1.msra.mxu0 %v26
  %498 = vmatprep.subr.mxu0 0.0
  %499 = vmatpush1.msra.mxu0 %v27
  %500 = vmatprep.subr.mxu0 0.0
  %501 = vmatpush1.msra.mxu0 %v28
  %502 = vmatprep.subr.mxu0 0.0
  %503 = vmatpush1.msra.mxu0 %v29
  %504 = vmatprep.subr.mxu0 0.0
  %505 = vmatpush1.msra.mxu0 %v30
  %506 = vmatprep.subr.mxu0 0.0
  %507 = vmatpush1.msra.mxu0 %v31
  %508 = vmatprep.subr.mxu0 0.0
  %509 = vmatpush1.msra.mxu0 0.0
  %510 = vmatprep.subr.mxu0 0.0
  %511 = vmatpush1.msra.mxu0 0.0
  %512 = vmatprep.subr.mxu0 0.0
  %513 = vmatpush1.msra.mxu0 0.0
  %514 = vmatprep.subr.mxu0 0.0
  %515 = vmatpush1.msra.mxu0 0.0
  %516 = vmatprep.subr.mxu0 0.0
  %517 = vmatpush1.msra.mxu0 0.0
  %518 = vmatprep.subr.mxu0 0.0
  %519 = vmatpush1.msra.mxu0 0.0
  %520 = vmatprep.subr.mxu0 0.0
  %521 = vmatpush1.msra.mxu0 0.0
  %522 = vmatprep.subr.mxu0 0.0
  %523 = vmatpush1.msra.mxu0 0.0
  %524 = vmatprep.subr.mxu0 0.0
  %525 = vmatpush1.msra.mxu0 0.0
  %526 = vmatprep.subr.mxu0 0.0
  %527 = vmatpush1.msra.mxu0 0.0
  %528 = vmatprep.subr.mxu0 0.0
  %529 = vmatpush1.msra.mxu0 0.0
  %530 = vmatprep.subr.mxu0 0.0
  %531 = vmatpush1.msra.mxu0 0.0
  %532 = vmatprep.subr.mxu0 0.0
  %533 = vmatpush1.msra.mxu0 0.0
  %534 = vmatprep.subr.mxu0 0.0
  %535 = vmatpush1.msra.mxu0 0.0
  %536 = vmatprep.subr.mxu0 0.0
  %537 = vmatpush1.msra.mxu0 0.0
  %538 = vmatprep.subr.mxu0 0.0
  %539 = vmatpush1.msra.mxu0 0.0
  %540 = vmatprep.mubr.f32.mxu0 0.0
  %541 = vmatmul.mubr.f32.gmra.mrb[0].mxu0 %v475
  %v542 = vpop.f32.mrb[0].mxu0
  %v543 = vadd.f32 0.0, %v542
  %v544 = vpop.f32.mrb[0].mxu0
  %545 = vdwg.mxu0
  %s546 = scalar_lea.vmem %s0, 48
  %v547 = vld [vmem:[%s546] sm:$0xff]
  %v548 = vadd.f32 %v547, %v543
  %v549 = vtanh.pop %v548
  %550 = vmatprep.subr.mxu0 0.0
  %551 = vmatpush1.msra.mxu0 %v16
  %552 = vmatprep.subr.mxu0 0.0
  %553 = vmatpush1.msra.mxu0 %v17
  %554 = vmatprep.subr.mxu0 0.0
  %555 = vmatpush1.msra.mxu0 %v18
  %556 = vmatprep.subr.mxu0 0.0
  %557 = vmatpush1.msra.mxu0 %v19
  %558 = vmatprep.subr.mxu0 0.0
  %559 = vmatpush1.msra.mxu0 %v20
  %560 = vmatprep.subr.mxu0 0.0
  %561 = vmatpush1.msra.mxu0 %v21
  %562 = vmatprep.subr.mxu0 0.0
  %563 = vmatpush1.msra.mxu0 %v22
  %564 = vmatprep.subr.mxu0 0.0
  %565 = vmatpush1.msra.mxu0 %v23
  %566 = vmatprep.subr.mxu0 0.0
  %567 = vmatpush1.msra.mxu0 %v24
  %568 = vmatprep.subr.mxu0 0.0
  %569 = vmatpush1.msra.mxu0 %v25
  %570 = vmatprep.subr.mxu0 0.0
  %571 = vmatpush1.msra.mxu0 %v26
  %572 = vmatprep.subr.mxu0 0.0
  %573 = vmatpush1.msra.mxu0 %v27
  %574 = vmatprep.subr.mxu0 0.0
  %575 = vmatpush1.msra.mxu0 %v28
  %576 = vmatprep.subr.mxu0 0.0
  %577 = vmatpush1.msra.mxu0 %v29
  %578 = vmatprep.subr.mxu0 0.0
  %579 = vmatpush1.msra.mxu0 %v30
  %580 = vmatprep.subr.mxu0 0.0
  %581 = vmatpush1.msra.mxu0 %v31
  %582 = vmatprep.subr.mxu0 0.0
  %583 = vmatpush1.msra.mxu0 0.0
  %584 = vmatprep.subr.mxu0 0.0
  %585 = vmatpush1.msra.mxu0 0.0
  %586 = vmatprep.subr.mxu0 0.0
  %587 = vmatpush1.msra.mxu0 0.0
  %588 = vmatprep.subr.mxu0 0.0
  %589 = vmatpush1.msra.mxu0 0.0
  %590 = vmatprep.subr.mxu0 0.0
  %591 = vmatpush1.msra.mxu0 0.0
  %592 = vmatprep.subr.mxu0 0.0
  %593 = vmatpush1.msra.mxu0 0.0
  %594 = vmatprep.subr.mxu0 0.0
  %595 = vmatpush1.msra.mxu0 0.0
  %596 = vmatprep.subr.mxu0 0.0
  %597 = vmatpush1.msra.mxu0 0.0
  %598 = vmatprep.subr.mxu0 0.0
  %599 = vmatpush1.msra.mxu0 0.0
  %600 = vmatprep.subr.mxu0 0.0
  %601 = vmatpush1.msra.mxu0 0.0
  %602 = vmatprep.subr.mxu0 0.0
  %603 = vmatpush1.msra.mxu0 0.0
  %604 = vmatprep.subr.mxu0 0.0
  %605 = vmatpush1.msra.mxu0 0.0
  %606 = vmatprep.subr.mxu0 0.0
  %607 = vmatpush1.msra.mxu0 0.0
  %608 = vmatprep.subr.mxu0 0.0
  %609 = vmatpush1.msra.mxu0 0.0
  %610 = vmatprep.subr.mxu0 0.0
  %611 = vmatpush1.msra.mxu0 0.0
  %612 = vmatprep.subr.mxu0 0.0
  %613 = vmatpush1.msra.mxu0 0.0
  %614 = vmatprep.mubr.f32.mxu0 0.0
  %615 = vmatmul.mubr.f32.gmra.mrb[0].mxu0 %v549
  %v616 = vpop.f32.mrb[0].mxu0
  %v617 = vadd.f32 0.0, %v616
  %v618 = vpop.f32.mrb[0].mxu0
  %619 = vdwg.mxu0
  %s620 = scalar_lea.vmem %s0, 56
  %v621 = vld [vmem:[%s620] sm:$0xff]
  %v622 = vadd.f32 %v621, %v617
  %v623 = vtanh.pop %v622
  %624 = vst [vmem:[#allocation2] sm:$0xff] %v623
  // Predicated region
  $region14: #{rnn_forward.1} parent=0 // pred_check
    %p625 = pneg %p11
  $region15: #{rnn_forward.1} parent=0 // pred_check_branch
    %627 = sbr.rel (%p625) target = $region17
  $region16: #{rnn_forward.1} parent=0 // pred_region
    %628 = vst [vmem:[%s2] sm:$0xff] %v623
  $region17: #{rnn_forward.1} parent=0 // pred_fallthru
    _
  // Predicated region
  $region18: #{rnn_forward.1} parent=0 // pred_check
    _
  $region19: #{rnn_forward.1} parent=0 // pred_check_branch
    %630 = sbr.rel (0) target = $region21
  $region20: #{rnn_forward.1} parent=0 // pred_region
    _
  $region21: #{rnn_forward.1} parent=0 // pred_fallthru
    _
  // Predicated region
  $region22: #{rnn_forward.1} parent=0 // pred_check
    _
  $region23: #{rnn_forward.1} parent=0 // pred_check_branch
    %632 = sbr.rel (0) target = $region25
  $region24: #{rnn_forward.1} parent=0 // pred_region
    _
  $region25: #{rnn_forward.1} parent=0 // pred_fallthru
    _

</llo_original>
